<compile_context>
chip_gen: v7x
topology: tpu7x:2x2x1
jax: 0.10.0
libtpu: 0.0.40
codegen_flags: <defaults>
</compile_context>

<pallas_src>
import functools

import jax
import jax.numpy as jnp
from jax.experimental import pallas as pl
from jax.experimental.pallas import tpu as pltpu


def _attentive_pooling_kernel(x_ref, w_ref, b_ref, u_ref, *rest,
                              hidden, has_mask):
    if has_mask:
        mask_ref, out_ref = rest
    else:
        (out_ref,) = rest

    x = x_ref[...]                                    # (N, Hin), native dtype

    # Single fused projection: h = tanh(x @ Wcat + bcat), f32 accumulation.
    h = jnp.dot(x, w_ref[...], preferred_element_type=jnp.float32)
    h = jnp.tanh(h + b_ref[...].astype(jnp.float32))  # (N, H) f32

    # score = u(h): VPU multiply + lane reduce (no 1-column MXU matmul).
    score = jnp.sum(h * u_ref[...].astype(jnp.float32),
                    axis=-1, keepdims=True)           # (N, 1) f32
    if has_mask:
        score = jnp.where(mask_ref[...] == 0, jnp.float32(-1e9), score)

    # Numerically stable softmax over the node (sublane) axis.
    m = jnp.max(score, axis=0, keepdims=True)
    e = jnp.exp(score - m)                            # (N, 1)
    denom = jnp.sum(e, axis=0, keepdims=True)         # (1, 1)

    # Weighted sum of the memory rows; the memory block is the first `hidden`
    # lanes of x (x == memory when there is no query).  Fold the single
    # softmax divide into the (1, H) result instead of dividing N scores.
    mem = x[:, :hidden].astype(jnp.float32)           # (N, H)
    acc = jnp.sum(e * mem, axis=0, keepdims=True)     # (1, H) f32
    out_ref[...] = (acc * pl.reciprocal(denom)).astype(out_ref.dtype)


def attentive_pooling(memory, params, query=None, mask=None):
    """memory: (node, hidden); optional query: (node, hidden); optional mask: (node,)."""
    N, H = memory.shape
    w1, b1, w2, b2, u = params
    has_mask = mask is not None

    # One-time wrapper-side layout work: pre-transpose weights to (in, out)
    # and fuse the two projections into a single matmul when query is given.
    if query is None:
        x = memory                                           # (N, H)
        w_cat = w1.T                                         # (H, H)
        b_cat = b1.reshape(1, H)
    else:
        x = jnp.concatenate([memory, query.astype(memory.dtype)], axis=-1)  # (N, 2H)
        w_cat = jnp.concatenate([w1.T, w2.T], axis=0)        # (2H, H)
        b_cat = (b1 + b2).reshape(1, H)
    u_row = u.reshape(1, H)

    inputs = [x, w_cat, b_cat, u_row]
    if has_mask:
        inputs.append(mask.reshape(N, 1).astype(jnp.int32))

    kernel = functools.partial(_attentive_pooling_kernel,
                               hidden=H, has_mask=has_mask)
    vmem = pl.BlockSpec(memory_space=pltpu.MemorySpace.VMEM)
    out = pl.pallas_call(
        kernel,
        out_shape=jax.ShapeDtypeStruct((1, H), memory.dtype),
        in_specs=[vmem] * len(inputs),
        out_specs=vmem,
    )(*inputs)
    return out[0]                                            # (hidden,)


def _reference(memory, params, query=None, mask=None):
    w1, b1, w2, b2, u = params
    h = memory @ w1.T + b1
    if query is not None:
        h = h + query @ w2.T + b2
    h = jnp.tanh(h)
    score = (h @ u.reshape(-1, 1))[:, 0]
    if mask is not None:
        score = jnp.where(mask == 0, -1e9, score)
    alpha = jax.nn.softmax(score, -1)
    return jnp.sum(alpha[:, None] * memory, axis=0)


if __name__ == "__main__":
    key = jax.random.PRNGKey(0)
    N, H = 8, 32  # (node, hidden)

    k = jax.random.split(key, 7)
    memory = jax.random.normal(k[0], (N, H), jnp.float32)
    query = jax.random.normal(k[1], (N, H), jnp.float32)
    # PyTorch Linear parameter shapes: weight (out, in), bias (out,)
    w1 = jax.random.normal(k[2], (H, H), jnp.float32) * 0.1
    b1 = jax.random.normal(k[3], (H,), jnp.float32) * 0.1
    w2 = jax.random.normal(k[4], (H, H), jnp.float32) * 0.1
    b2 = jax.random.normal(k[5], (H,), jnp.float32) * 0.1
    u = jax.random.normal(k[6], (H,), jnp.float32) * 0.1     # u: Linear(H, 1, bias=False)
    mask = (jnp.arange(N) < N - 2).astype(jnp.int32)          # mask the last 2 nodes

    params = (w1, b1, w2, b2, u)

    # with query + mask
    s = attentive_pooling(memory, params, query=query, mask=mask)
    s = jax.block_until_ready(s)
    ref = _reference(memory, params, query=query, mask=mask)
    assert s.shape == (H,)
    assert jnp.allclose(s, ref, atol=1e-5, rtol=1e-5)

    # query=None, mask=None path (fewer inputs DMA'd, single (N,H) matmul)
    s2 = attentive_pooling(memory, params)
    s2 = jax.block_until_ready(s2)
    ref2 = _reference(memory, params)
    assert jnp.allclose(s2, ref2, atol=1e-5, rtol=1e-5)

    print("KERNEL_OK")
</pallas_src>

<mosaic_0001>
module attributes {stable_mosaic.version = 11 : i64} {
  func.func @_attentive_pooling_kernel(%arg0: memref<8x64xf32, #tpu.memory_space<vmem>>, %arg1: memref<64x32xf32, #tpu.memory_space<vmem>>, %arg2: memref<1x32xf32, #tpu.memory_space<vmem>>, %arg3: memref<1x32xf32, #tpu.memory_space<vmem>>, %arg4: memref<8x1xi32, #tpu.memory_space<vmem>>, %arg5: memref<1x32xf32, #tpu.memory_space<vmem>>) attributes {dimension_semantics = [], scalar_prefetch = 0 : i64, scratch_operands = 0 : i64, tpu.core_type = #tpu.core_type<tc>} {
    %c0 = arith.constant 0 : index
    %c0_0 = arith.constant 0 : index
    %0 = vector.load %arg0[%c0, %c0_0] : memref<8x64xf32, #tpu.memory_space<vmem>>, vector<8x64xf32>
    %c0_1 = arith.constant 0 : index
    %c0_2 = arith.constant 0 : index
    %1 = vector.load %arg1[%c0_1, %c0_2] : memref<64x32xf32, #tpu.memory_space<vmem>>, vector<64x32xf32>
    %cst = arith.constant dense<0.000000e+00> : vector<8x32xf32>
    %2 = tpu.matmul %0, %1, %cst {dimension_numbers = #tpu.dot_dimension_numbers<[1], [0], [0], [1], [0, 0, 1, 1], [], []>} : vector<8x64xf32>, vector<64x32xf32>, vector<8x32xf32> -> vector<8x32xf32>
    %c0_3 = arith.constant 0 : index
    %c0_4 = arith.constant 0 : index
    %3 = vector.load %arg2[%c0_3, %c0_4] : memref<1x32xf32, #tpu.memory_space<vmem>>, vector<1x32xf32>
    %4 = vector.broadcast %3 : vector<1x32xf32> to vector<8x32xf32>
    %5 = arith.addf %2, %4 : vector<8x32xf32>
    %6 = math.tanh %5 : vector<8x32xf32>
    %c0_5 = arith.constant 0 : index
    %c0_6 = arith.constant 0 : index
    %7 = vector.load %arg3[%c0_5, %c0_6] : memref<1x32xf32, #tpu.memory_space<vmem>>, vector<1x32xf32>
    %8 = vector.broadcast %7 : vector<1x32xf32> to vector<8x32xf32>
    %9 = arith.mulf %6, %8 : vector<8x32xf32>
    %cst_7 = arith.constant dense<0.000000e+00> : vector<8xf32>
    %10 = vector.multi_reduction <add>, %9, %cst_7 [1] : vector<8x32xf32> to vector<8xf32>
    %11 = vector.shape_cast %10 : vector<8xf32> to vector<8x1xf32>
    %c0_8 = arith.constant 0 : index
    %c0_9 = arith.constant 0 : index
    %12 = vector.load %arg4[%c0_8, %c0_9] : memref<8x1xi32, #tpu.memory_space<vmem>>, vector<8x1xi32>
    %c0_i32 = arith.constant 0 : i32
    %13 = vector.broadcast %c0_i32 : i32 to vector<8x1xi32>
    %14 = arith.cmpi eq, %12, %13 : vector<8x1xi32>
    %cst_10 = arith.constant -1.000000e+09 : f32
    %15 = vector.broadcast %cst_10 : f32 to vector<8x1xf32>
    %16 = arith.select %14, %15, %11 : vector<8x1xi1>, vector<8x1xf32>
    %cst_11 = arith.constant dense<0xFF800000> : vector<1xf32>
    %17 = vector.multi_reduction <maximumf>, %16, %cst_11 [0] : vector<8x1xf32> to vector<1xf32>
    %18 = vector.shape_cast %17 : vector<1xf32> to vector<1x1xf32>
    %19 = vector.broadcast %18 : vector<1x1xf32> to vector<8x1xf32>
    %20 = arith.subf %16, %19 : vector<8x1xf32>
    %21 = math.exp %20 : vector<8x1xf32>
    %cst_12 = arith.constant dense<0.000000e+00> : vector<1xf32>
    %22 = vector.multi_reduction <add>, %21, %cst_12 [0] : vector<8x1xf32> to vector<1xf32>
    %23 = vector.shape_cast %22 : vector<1xf32> to vector<1x1xf32>
    %24 = vector.extract_strided_slice %0 {offsets = [0, 0], sizes = [8, 32], strides = [1, 1]} : vector<8x64xf32> to vector<8x32xf32>
    %25 = vector.broadcast %21 : vector<8x1xf32> to vector<8x32xf32>
    %26 = arith.mulf %25, %24 : vector<8x32xf32>
    %cst_13 = arith.constant dense<0.000000e+00> : vector<32xf32>
    %27 = vector.multi_reduction <add>, %26, %cst_13 [0] : vector<8x32xf32> to vector<32xf32>
    %28 = vector.shape_cast %27 : vector<32xf32> to vector<1x32xf32>
    %29 = tpu.reciprocal %23 : vector<1x1xf32> -> vector<1x1xf32>
    %30 = vector.broadcast %29 : vector<1x1xf32> to vector<1x32xf32>
    %31 = arith.mulf %28, %30 : vector<1x32xf32>
    %c0_14 = arith.constant 0 : index
    %c0_15 = arith.constant 0 : index
    %32 = vector.load %arg5[%c0_14, %c0_15] : memref<1x32xf32, #tpu.memory_space<vmem>>, vector<1x32xf32>
    tpu.vector_store %arg5[%c0_14, %c0_15], %31 {strides = array<i32>} : memref<1x32xf32, #tpu.memory_space<vmem>>, vector<1x32xf32>,
    return
  }
}

</mosaic_0001>

<llo_original>
// kernel: tpu_custom_call.1
$region0: #{tpu_custom_call.1}
  #allocation0 [shape = 'u32[]', space=smem, size = 0x4, offset = 0x4, fixed_abs, tag = 'smem constant byte address 0x4 - core index']
  #allocation1 [shape = 'u32[144,128]{1,0:T(1,128)}', space=vmem, size = 0x12000, scoped, tag = 'internal scratch']
  %s0 = inlined_call_operand.vmem [shape: f32[8,64], index: 0, kind: input, shape index: {}]
  %s1 = inlined_call_operand.vmem [shape: f32[64,32], index: 1, kind: input, shape index: {}]
  %s2 = inlined_call_operand.vmem [shape: f32[1,32], index: 2, kind: input, shape index: {}]
  %s3 = inlined_call_operand.vmem [shape: f32[1,32], index: 3, kind: input, shape index: {}]
  %s4 = inlined_call_operand.vmem [shape: s32[8,1], index: 4, kind: input, shape index: {}]
  %s5 = inlined_call_operand.hbm [shape: f32[1,32], index: 5, kind: output, shape index: {}]
  %s6 = sld [smem:[#allocation0]]
  $region30: #{tpu_custom_call.1} parent=0
    _
  %s8 = ssub.s32 1, %s6
  %s9 = scalar_select 0, %s8, %s6
  $region1: #{tpu_custom_call.1} parent=0
    #allocation2 [shape = 'u8[512]{0}', space=vmem, size = 0x400, scoped, tag = 'output window, operand 0, single buffered']
    #allocation3 [shape = 's32[1]{0}', space=sflag, size = 0x4, scoped, tag = 'scoped memory for tpu_custom_call.1']
    %10 = vsyncpa [#allocation3], 0
    // Predicated region
    $region2: #{tpu_custom_call.1} parent=1 // pred_check
      _
    $region3: #{tpu_custom_call.1} parent=1 // pred_check_branch
      %12 = sbr.rel (0) target = $region5
    $region4: #{tpu_custom_call.1} parent=1 // pred_region
      _
    $region5: #{tpu_custom_call.1} parent=1 // pred_fallthru
      _
    // Predicated region
    $region6: #{tpu_custom_call.1} parent=1 // pred_check
      _
    $region7: #{tpu_custom_call.1} parent=1 // pred_check_branch
      %14 = sbr.rel (0) target = $region9
    $region8: #{tpu_custom_call.1} parent=1 // pred_region
      _
    $region9: #{tpu_custom_call.1} parent=1 // pred_fallthru
      _
    // Predicated region
    $region10: #{tpu_custom_call.1} parent=1 // pred_check
      _
    $region11: #{tpu_custom_call.1} parent=1 // pred_check_branch
      %16 = sbr.rel (0) target = $region13
    $region12: #{tpu_custom_call.1} parent=1 // pred_region
      _
    $region13: #{tpu_custom_call.1} parent=1 // pred_fallthru
      _
    // Predicated region
    $region14: #{tpu_custom_call.1} parent=1 // pred_check
      _
    $region15: #{tpu_custom_call.1} parent=1 // pred_check_branch
      %18 = sbr.rel (0) target = $region17
    $region16: #{tpu_custom_call.1} parent=1 // pred_region
      _
    $region17: #{tpu_custom_call.1} parent=1 // pred_fallthru
      _
    // Predicated region
    $region18: #{tpu_custom_call.1} parent=1 // pred_check
      _
    $region19: #{tpu_custom_call.1} parent=1 // pred_check_branch
      %20 = sbr.rel (0) target = $region21
    $region20: #{tpu_custom_call.1} parent=1 // pred_region
      _
    $region21: #{tpu_custom_call.1} parent=1 // pred_fallthru
      _
    %v21 = vld [vmem:[%s0] sm:$0xff]
    %v22 = vld [vmem:[%s1] sm:$0xff]
    %v23 = vld [vmem:[%s1 + $0x8] sm:$0xff]
    %v24 = vld [vmem:[%s1 + $0x10] sm:$0xff]
    %v25 = vld [vmem:[%s1 + $0x18] sm:$0xff]
    %v26 = vld [vmem:[%s1 + $0x20] sm:$0xff]
    %v27 = vld [vmem:[%s1 + $0x28] sm:$0xff]
    %v28 = vld [vmem:[%s1 + $0x30] sm:$0xff]
    %v29 = vld [vmem:[%s1 + $0x38] sm:$0xff]
    %v30 = vld [vmem:[%s2] sm:$0x1]
    %v32 = vlaneseq
    %v33 = vshrl.u32 %v32, 7
    %v34 = vsub.s32 0, %v33
    %v35 = vrot.slane %v30, %v34
    %vm37 = vcmask 523264
    %v39 = vsel %vm37, %v21, 0
    %41 = vmatprep.subr.mxu0 0.0
    %42 = vmatpush1.msra.mxu0 %v22
    %43 = vmatprep.subr.mxu0 0.0
    %44 = vmatpush1.msra.mxu0 %v23
    %45 = vmatprep.subr.mxu0 0.0
    %46 = vmatpush1.msra.mxu0 %v24
    %47 = vmatprep.subr.mxu0 0.0
    %48 = vmatpush1.msra.mxu0 %v25
    %49 = vmatprep.subr.mxu0 0.0
    %50 = vmatpush1.msra.mxu0 %v26
    %51 = vmatprep.subr.mxu0 0.0
    %52 = vmatpush1.msra.mxu0 %v27
    %53 = vmatprep.subr.mxu0 0.0
    %54 = vmatpush1.msra.mxu0 %v28
    %55 = vmatprep.subr.mxu0 0.0
    %56 = vmatpush1.msra.mxu0 %v29
    %57 = vmatprep.subr.mxu0 0.0
    %58 = vmatpush1.msra.mxu0 0.0
    %59 = vmatprep.subr.mxu0 0.0
    %60 = vmatpush1.msra.mxu0 0.0
    %61 = vmatprep.subr.mxu0 0.0
    %62 = vmatpush1.msra.mxu0 0.0
    %63 = vmatprep.subr.mxu0 0.0
    %64 = vmatpush1.msra.mxu0 0.0
    %65 = vmatprep.subr.mxu0 0.0
    %66 = vmatpush1.msra.mxu0 0.0
    %67 = vmatprep.subr.mxu0 0.0
    %68 = vmatpush1.msra.mxu0 0.0
    %69 = vmatprep.subr.mxu0 0.0
    %70 = vmatpush1.msra.mxu0 0.0
    %71 = vmatprep.subr.mxu0 0.0
    %72 = vmatpush1.msra.mxu0 0.0
    %73 = vmatprep.subr.mxu0 0.0
    %74 = vmatpush1.msra.mxu0 0.0
    %75 = vmatprep.subr.mxu0 0.0
    %76 = vmatpush1.msra.mxu0 0.0
    %77 = vmatprep.subr.mxu0 0.0
    %78 = vmatpush1.msra.mxu0 0.0
    %79 = vmatprep.subr.mxu0 0.0
    %80 = vmatpush1.msra.mxu0 0.0
    %81 = vmatprep.subr.mxu0 0.0
    %82 = vmatpush1.msra.mxu0 0.0
    %83 = vmatprep.subr.mxu0 0.0
    %84 = vmatpush1.msra.mxu0 0.0
    %85 = vmatprep.subr.mxu0 0.0
    %86 = vmatpush1.msra.mxu0 0.0
    %87 = vmatprep.subr.mxu0 0.0
    %88 = vmatpush1.msra.mxu0 0.0
    %89 = vmatprep.subr.mxu0 0.0
    %90 = vmatpush1.msra.mxu0 0.0
    %91 = vmatprep.subr.mxu0 0.0
    %92 = vmatpush1.msra.mxu0 0.0
    %93 = vmatprep.subr.mxu0 0.0
    %94 = vmatpush1.msra.mxu0 0.0
    %95 = vmatprep.subr.mxu0 0.0
    %96 = vmatpush1.msra.mxu0 0.0
    %97 = vmatprep.subr.mxu0 0.0
    %98 = vmatpush1.msra.mxu0 0.0
    %99 = vmatprep.subr.mxu0 0.0
    %100 = vmatpush1.msra.mxu0 0.0
    %101 = vmatprep.subr.mxu0 0.0
    %102 = vmatpush1.msra.mxu0 0.0
    %103 = vmatprep.subr.mxu0 0.0
    %104 = vmatpush1.msra.mxu0 0.0
    %105 = vmatprep.mubr.f32.mxu0 0.0
    %106 = vmatmul.mubr.f32.gmra.mrb[0].mxu0 %v39
    %v107 = vpop.f32.mrb[0].mxu0
    %v108 = vadd.f32 %v35, %v107
    %v109 = vpop.f32.mrb[0].mxu0
    %110 = vdwg.mxu0
    %v111 = vtanh.pop %v108
    %v112 = vld [vmem:[%s3] sm:$0x1]
    %v114 = vlaneseq
    %v115 = vshrl.u32 %v114, 7
    %v116 = vsub.s32 0, %v115
    %v117 = vrot.slane %v112, %v116
    %v119 = vmul.f32 %v111, %v117
    %vm120 = vcmask 261120
    %v121 = vsel %vm120, %v119, 0.0
    %122 = vadd.xlane.f32.xlu0 %v121
    %v123 = vpop.xlane.xlu0 %122
    %v124 = vld [vmem:[%s4] sm:$0xff]
    %vm125 = vcmp.eq.s32.totalorder %v124, 0
    %v126 = vsel %vm125, -1e+09, %v123
    %vm127 = vcmask 7168
    %v128 = vsel %vm127, %v126, -inf
    %v129 = vrot.slane %v128, 4
    %v130 = vmax.f32 %v128, %v129
    %v131 = vrot.slane %v130, 2
    %v132 = vmax.f32 %v130, %v131
    %v133 = vrot.slane %v132, 1
    %v134 = vmax.f32 %v132, %v133
    %v135 = vsub.f32 %v126, %v134
    %v136 = vmul.f32 %v135, 1.442695
    %v137 = vpow.pop %v136
    %v138 = vsel %vm127, %v137, 0.0
    %v139 = vrot.slane %v138, 4
    %v140 = vadd.f32 %v138, %v139
    %v141 = vrot.slane %v140, 2
    %v142 = vadd.f32 %v140, %v141
    %v143 = vrot.slane %v142, 1
    %v144 = vadd.f32 %v142, %v143
    %146 = vset.pattern.permute.xlu0 0
    %147 = vperm.xlu0 %146, %v137
    %v148 = vpop.permute.xlu0 %147
    %v150 = vmul.f32 %v148, %v21
    %v151 = vsel %vm120, %v150, 0.0
    %v152 = vrot.slane %v151, 4
    %v153 = vadd.f32 %v151, %v152
    %v154 = vrot.slane %v153, 2
    %v155 = vadd.f32 %v153, %v154
    %v156 = vrot.slane %v155, 1
    %v157 = vadd.f32 %v155, %v156
    %v158 = vrcp.pop %v144
    %160 = vset.pattern.permute.xlu0 0
    %161 = vperm.xlu0 %160, %v158
    %v162 = vpop.permute.xlu0 %161
    %v164 = vmul.f32 %v157, %v162
    %vm165 = vcmask 253952
    %166 = vst.msk [vmem:[#allocation2] sm:$0x1] %vm165, %v164
    // Predicated region
    $region22: #{tpu_custom_call.1} parent=1 // pred_check
      _
    $region23: #{tpu_custom_call.1} parent=1 // pred_check_branch
      %168 = sbr.rel (0) target = $region25
    $region24: #{tpu_custom_call.1} parent=1 // pred_region
      %s170 = ssub.s32 16, 16
      %171 = vsyncadd [#allocation3], %s170
      %s173 = sshll.u32 [#allocation2], 4
      %s174 = int_to_ptr.vmem [resolvable:$true] %s173
      %176 = dma.vmem_to_hbm [thread:$0]  %s174, 16, %s5, [#allocation3]
    $region25: #{tpu_custom_call.1} parent=1 // pred_fallthru
      _
    // Predicated region
    $region26: #{tpu_custom_call.1} parent=1 // pred_check
      _
    $region27: #{tpu_custom_call.1} parent=1 // pred_check_branch
      %178 = sbr.rel (0) target = $region29
    $region28: #{tpu_custom_call.1} parent=1 // pred_region
      %179 = dma.done [#allocation3], 16
    $region29: #{tpu_custom_call.1} parent=1 // pred_fallthru
      _
    %180 = vsyncpa [#allocation3], 1

</llo_original>
